<compile_context>
chip_gen: v6e
topology: v6e:2x2x1
jax: 0.10.0
libtpu: 0.0.40
codegen_flags: <defaults>
</compile_context>

<pallas_src>
import functools

import jax
import jax.numpy as jnp
from jax.experimental import pallas as pl
from jax.experimental.pallas import tpu as pltpu

INPUT_SIZE = 5
HIDDEN_SIZE = 100
OUTPUT_SIZE = 5


def _rnn_kernel(x_ref, wih_ref, whh_ref, b_ref, wfc_ref, bfc_ref, o_ref):
    """Single invocation: full RNN forward.

    x_ref   : (B, T, I)   full input, batch-first (native layout)
    wih_ref : (I, Hp)     W_ih^T, zero-padded to Hp lanes
    whh_ref : (Hp, Hp)    W_hh^T, zero-padded
    b_ref   : (1, Hp)     b_ih + b_hh, zero-padded
    wfc_ref : (Hp, O)     W_fc^T, zero-padded rows
    bfc_ref : (1, O)      b_fc
    o_ref   : (B, T, O)   full output, batch-first
    """
    B, T, I = x_ref.shape
    Hp = whh_ref.shape[0]
    O = o_ref.shape[-1]

    x = x_ref[...]                                   # (B, T, I) f32
    whh = whh_ref[...]                               # (Hp, Hp)

    # Hoisted input projection: one matmul for all timesteps, bias folded in.
    xproj = (jnp.dot(x.reshape(B * T, I), wih_ref[...],
                     preferred_element_type=jnp.float32)
             + b_ref[...]).reshape(B, T, Hp)         # (B, T, Hp)

    # Serial recurrence; h carried in vregs (one (8,128) tile), loop unrolled
    # since T is small and static.
    h = jnp.zeros((B, Hp), jnp.float32)
    hs = []
    for t in range(T):
        h = jnp.maximum(
            xproj[:, t, :]
            + jnp.dot(h, whh, preferred_element_type=jnp.float32),
            0.0)
        hs.append(h)

    # Deferred output head: one matmul + one sigmoid + one store.
    h_all = jnp.stack(hs, axis=1)                    # (B, T, Hp)
    logits = (jnp.dot(h_all.reshape(B * T, Hp), wfc_ref[...],
                      preferred_element_type=jnp.float32)
              + bfc_ref[...]).reshape(B, T, O)       # (B, T, O)
    o_ref[...] = jax.nn.sigmoid(logits).astype(o_ref.dtype)


@jax.jit
def identity_rnn_forward(x, w_ih, w_hh, b_ih, b_hh, w_fc, b_fc):
    """x: (B, T, input_size) float32, batch_first like the PyTorch module."""
    B, T, I = x.shape
    H = w_ih.shape[0]
    O = w_fc.shape[0]
    Hp = ((H + 127) // 128) * 128                    # pad hidden to lane width

    f32 = jnp.float32
    # Pre-transpose + zero-pad weights so the kernel does plain, lane-aligned
    # (rows, K) @ (K, N) matmuls.  Zero padding is exact (padded hidden lanes
    # stay zero through the relu recurrence and are multiplied by zero rows of
    # W_fc in the head).
    wih_p = jnp.zeros((I, Hp), f32).at[:, :H].set(w_ih.T.astype(f32))
    whh_p = jnp.zeros((Hp, Hp), f32).at[:H, :H].set(w_hh.T.astype(f32))
    b_p = jnp.zeros((1, Hp), f32).at[0, :H].set((b_ih + b_hh).astype(f32))
    wfc_p = jnp.zeros((Hp, O), f32).at[:H, :].set(w_fc.T.astype(f32))
    bfc = b_fc.reshape(1, O).astype(f32)

    vmem = pl.BlockSpec(memory_space=pltpu.MemorySpace.VMEM)

    return pl.pallas_call(
        _rnn_kernel,
        out_shape=jax.ShapeDtypeStruct((B, T, O), f32),
        in_specs=[vmem, vmem, vmem, vmem, vmem, vmem],
        out_specs=vmem,
    )(x.astype(f32), wih_p, whh_p, b_p, wfc_p, bfc)


def _init_params(key, input_size, hidden_size, output_size):
    """Deterministic init mimicking PyTorch's U(-1/sqrt(H), 1/sqrt(H))."""
    ks = jax.random.split(key, 6)
    bound = 1.0 / jnp.sqrt(hidden_size)
    w_ih = jax.random.uniform(ks[0], (hidden_size, input_size),
                              minval=-bound, maxval=bound)
    w_hh = jax.random.uniform(ks[1], (hidden_size, hidden_size),
                              minval=-bound, maxval=bound)
    b_ih = jax.random.uniform(ks[2], (hidden_size,),
                              minval=-bound, maxval=bound)
    b_hh = jax.random.uniform(ks[3], (hidden_size,),
                              minval=-bound, maxval=bound)
    w_fc = jax.random.uniform(ks[4], (output_size, hidden_size),
                              minval=-bound, maxval=bound)
    b_fc = jax.random.uniform(ks[5], (output_size,),
                              minval=-bound, maxval=bound)
    return w_ih, w_hh, b_ih, b_hh, w_fc, b_fc


def _reference_forward(x, w_ih, w_hh, b_ih, b_hh, w_fc, b_fc):
    """Pure-JAX reference of the same semantics (for a sanity check)."""
    B, T, _ = x.shape
    H = w_ih.shape[0]
    h = jnp.zeros((B, H), jnp.float32)
    outs = []
    for t in range(T):
        h = jax.nn.relu(x[:, t] @ w_ih.T + b_ih + h @ w_hh.T + b_hh)
        outs.append(jax.nn.sigmoid(h @ w_fc.T + b_fc))
    return jnp.stack(outs, axis=1)


if __name__ == "__main__":
    key = jax.random.PRNGKey(0)
    k_x, k_p = jax.random.split(key)

    B, T = 2, 8
    x = jax.random.normal(k_x, (B, T, INPUT_SIZE), dtype=jnp.float32)
    params = _init_params(k_p, INPUT_SIZE, HIDDEN_SIZE, OUTPUT_SIZE)

    out = identity_rnn_forward(x, *params)
    out = jax.block_until_ready(out)

    ref = _reference_forward(x, *params)
    assert out.shape == (B, T, OUTPUT_SIZE)
    assert jnp.allclose(out, ref, atol=1e-5, rtol=1e-5)

    print("KERNEL_OK")
</pallas_src>

<mosaic_0001>
module attributes {stable_mosaic.version = 11 : i64} {
  func.func @_rnn_kernel(%arg0: memref<2x8x5xf32, #tpu.memory_space<vmem>>, %arg1: memref<5x128xf32, #tpu.memory_space<vmem>>, %arg2: memref<128x128xf32, #tpu.memory_space<vmem>>, %arg3: memref<1x128xf32, #tpu.memory_space<vmem>>, %arg4: memref<128x5xf32, #tpu.memory_space<vmem>>, %arg5: memref<1x5xf32, #tpu.memory_space<vmem>>, %arg6: memref<2x8x5xf32, #tpu.memory_space<vmem>>) attributes {dimension_semantics = [], scalar_prefetch = 0 : i64, scratch_operands = 0 : i64, tpu.core_type = #tpu.core_type<tc>} {
    %c0 = arith.constant 0 : index
    %c0_0 = arith.constant 0 : index
    %c0_1 = arith.constant 0 : index
    %0 = vector.load %arg0[%c0, %c0_0, %c0_1] : memref<2x8x5xf32, #tpu.memory_space<vmem>>, vector<2x8x5xf32>
    %c0_2 = arith.constant 0 : index
    %c0_3 = arith.constant 0 : index
    %1 = vector.load %arg2[%c0_2, %c0_3] : memref<128x128xf32, #tpu.memory_space<vmem>>, vector<128x128xf32>
    %2 = vector.shape_cast %0 : vector<2x8x5xf32> to vector<16x5xf32>
    %c0_4 = arith.constant 0 : index
    %c0_5 = arith.constant 0 : index
    %3 = vector.load %arg1[%c0_4, %c0_5] : memref<5x128xf32, #tpu.memory_space<vmem>>, vector<5x128xf32>
    %cst = arith.constant dense<0.000000e+00> : vector<16x128xf32>
    %4 = tpu.matmul %2, %3, %cst {dimension_numbers = #tpu.dot_dimension_numbers<[1], [0], [0], [1], [0, 0, 1, 1], [], []>} : vector<16x5xf32>, vector<5x128xf32>, vector<16x128xf32> -> vector<16x128xf32>
    %c0_6 = arith.constant 0 : index
    %c0_7 = arith.constant 0 : index
    %5 = vector.load %arg3[%c0_6, %c0_7] : memref<1x128xf32, #tpu.memory_space<vmem>>, vector<1x128xf32>
    %6 = vector.broadcast %5 : vector<1x128xf32> to vector<16x128xf32>
    %7 = arith.addf %4, %6 : vector<16x128xf32>
    %8 = vector.shape_cast %7 : vector<16x128xf32> to vector<2x8x128xf32>
    %cst_8 = arith.constant 0.000000e+00 : f32
    %9 = vector.broadcast %cst_8 : f32 to vector<2x128xf32>
    %10 = vector.extract_strided_slice %8 {offsets = [0, 0, 0], sizes = [2, 1, 128], strides = [1, 1, 1]} : vector<2x8x128xf32> to vector<2x1x128xf32>
    %11 = vector.shape_cast %10 : vector<2x1x128xf32> to vector<2x128xf32>
    %cst_9 = arith.constant dense<0.000000e+00> : vector<2x128xf32>
    %12 = tpu.matmul %9, %1, %cst_9 {dimension_numbers = #tpu.dot_dimension_numbers<[1], [0], [0], [1], [0, 0, 1, 1], [], []>} : vector<2x128xf32>, vector<128x128xf32>, vector<2x128xf32> -> vector<2x128xf32>
    %13 = arith.addf %11, %12 : vector<2x128xf32>
    %cst_10 = arith.constant 0.000000e+00 : f32
    %14 = vector.broadcast %cst_10 : f32 to vector<2x128xf32>
    %15 = arith.maximumf %13, %14 : vector<2x128xf32>
    %16 = vector.extract_strided_slice %8 {offsets = [0, 1, 0], sizes = [2, 1, 128], strides = [1, 1, 1]} : vector<2x8x128xf32> to vector<2x1x128xf32>
    %17 = vector.shape_cast %16 : vector<2x1x128xf32> to vector<2x128xf32>
    %cst_11 = arith.constant dense<0.000000e+00> : vector<2x128xf32>
    %18 = tpu.matmul %15, %1, %cst_11 {dimension_numbers = #tpu.dot_dimension_numbers<[1], [0], [0], [1], [0, 0, 1, 1], [], []>} : vector<2x128xf32>, vector<128x128xf32>, vector<2x128xf32> -> vector<2x128xf32>
    %19 = arith.addf %17, %18 : vector<2x128xf32>
    %cst_12 = arith.constant 0.000000e+00 : f32
    %20 = vector.broadcast %cst_12 : f32 to vector<2x128xf32>
    %21 = arith.maximumf %19, %20 : vector<2x128xf32>
    %22 = vector.extract_strided_slice %8 {offsets = [0, 2, 0], sizes = [2, 1, 128], strides = [1, 1, 1]} : vector<2x8x128xf32> to vector<2x1x128xf32>
    %23 = vector.shape_cast %22 : vector<2x1x128xf32> to vector<2x128xf32>
    %cst_13 = arith.constant dense<0.000000e+00> : vector<2x128xf32>
    %24 = tpu.matmul %21, %1, %cst_13 {dimension_numbers = #tpu.dot_dimension_numbers<[1], [0], [0], [1], [0, 0, 1, 1], [], []>} : vector<2x128xf32>, vector<128x128xf32>, vector<2x128xf32> -> vector<2x128xf32>
    %25 = arith.addf %23, %24 : vector<2x128xf32>
    %cst_14 = arith.constant 0.000000e+00 : f32
    %26 = vector.broadcast %cst_14 : f32 to vector<2x128xf32>
    %27 = arith.maximumf %25, %26 : vector<2x128xf32>
    %28 = vector.extract_strided_slice %8 {offsets = [0, 3, 0], sizes = [2, 1, 128], strides = [1, 1, 1]} : vector<2x8x128xf32> to vector<2x1x128xf32>
    %29 = vector.shape_cast %28 : vector<2x1x128xf32> to vector<2x128xf32>
    %cst_15 = arith.constant dense<0.000000e+00> : vector<2x128xf32>
    %30 = tpu.matmul %27, %1, %cst_15 {dimension_numbers = #tpu.dot_dimension_numbers<[1], [0], [0], [1], [0, 0, 1, 1], [], []>} : vector<2x128xf32>, vector<128x128xf32>, vector<2x128xf32> -> vector<2x128xf32>
    %31 = arith.addf %29, %30 : vector<2x128xf32>
    %cst_16 = arith.constant 0.000000e+00 : f32
    %32 = vector.broadcast %cst_16 : f32 to vector<2x128xf32>
    %33 = arith.maximumf %31, %32 : vector<2x128xf32>
    %34 = vector.extract_strided_slice %8 {offsets = [0, 4, 0], sizes = [2, 1, 128], strides = [1, 1, 1]} : vector<2x8x128xf32> to vector<2x1x128xf32>
    %35 = vector.shape_cast %34 : vector<2x1x128xf32> to vector<2x128xf32>
    %cst_17 = arith.constant dense<0.000000e+00> : vector<2x128xf32>
    %36 = tpu.matmul %33, %1, %cst_17 {dimension_numbers = #tpu.dot_dimension_numbers<[1], [0], [0], [1], [0, 0, 1, 1], [], []>} : vector<2x128xf32>, vector<128x128xf32>, vector<2x128xf32> -> vector<2x128xf32>
    %37 = arith.addf %35, %36 : vector<2x128xf32>
    %cst_18 = arith.constant 0.000000e+00 : f32
    %38 = vector.broadcast %cst_18 : f32 to vector<2x128xf32>
    %39 = arith.maximumf %37, %38 : vector<2x128xf32>
    %40 = vector.extract_strided_slice %8 {offsets = [0, 5, 0], sizes = [2, 1, 128], strides = [1, 1, 1]} : vector<2x8x128xf32> to vector<2x1x128xf32>
    %41 = vector.shape_cast %40 : vector<2x1x128xf32> to vector<2x128xf32>
    %cst_19 = arith.constant dense<0.000000e+00> : vector<2x128xf32>
    %42 = tpu.matmul %39, %1, %cst_19 {dimension_numbers = #tpu.dot_dimension_numbers<[1], [0], [0], [1], [0, 0, 1, 1], [], []>} : vector<2x128xf32>, vector<128x128xf32>, vector<2x128xf32> -> vector<2x128xf32>
    %43 = arith.addf %41, %42 : vector<2x128xf32>
    %cst_20 = arith.constant 0.000000e+00 : f32
    %44 = vector.broadcast %cst_20 : f32 to vector<2x128xf32>
    %45 = arith.maximumf %43, %44 : vector<2x128xf32>
    %46 = vector.extract_strided_slice %8 {offsets = [0, 6, 0], sizes = [2, 1, 128], strides = [1, 1, 1]} : vector<2x8x128xf32> to vector<2x1x128xf32>
    %47 = vector.shape_cast %46 : vector<2x1x128xf32> to vector<2x128xf32>
    %cst_21 = arith.constant dense<0.000000e+00> : vector<2x128xf32>
    %48 = tpu.matmul %45, %1, %cst_21 {dimension_numbers = #tpu.dot_dimension_numbers<[1], [0], [0], [1], [0, 0, 1, 1], [], []>} : vector<2x128xf32>, vector<128x128xf32>, vector<2x128xf32> -> vector<2x128xf32>
    %49 = arith.addf %47, %48 : vector<2x128xf32>
    %cst_22 = arith.constant 0.000000e+00 : f32
    %50 = vector.broadcast %cst_22 : f32 to vector<2x128xf32>
    %51 = arith.maximumf %49, %50 : vector<2x128xf32>
    %52 = vector.extract_strided_slice %8 {offsets = [0, 7, 0], sizes = [2, 1, 128], strides = [1, 1, 1]} : vector<2x8x128xf32> to vector<2x1x128xf32>
    %53 = vector.shape_cast %52 : vector<2x1x128xf32> to vector<2x128xf32>
    %cst_23 = arith.constant dense<0.000000e+00> : vector<2x128xf32>
    %54 = tpu.matmul %51, %1, %cst_23 {dimension_numbers = #tpu.dot_dimension_numbers<[1], [0], [0], [1], [0, 0, 1, 1], [], []>} : vector<2x128xf32>, vector<128x128xf32>, vector<2x128xf32> -> vector<2x128xf32>
    %55 = arith.addf %53, %54 : vector<2x128xf32>
    %cst_24 = arith.constant 0.000000e+00 : f32
    %56 = vector.broadcast %cst_24 : f32 to vector<2x128xf32>
    %57 = arith.maximumf %55, %56 : vector<2x128xf32>
    %58 = vector.shape_cast %15 : vector<2x128xf32> to vector<2x1x128xf32>
    %59 = vector.shape_cast %21 : vector<2x128xf32> to vector<2x1x128xf32>
    %60 = vector.shape_cast %27 : vector<2x128xf32> to vector<2x1x128xf32>
    %61 = vector.shape_cast %33 : vector<2x128xf32> to vector<2x1x128xf32>
    %62 = vector.shape_cast %39 : vector<2x128xf32> to vector<2x1x128xf32>
    %63 = vector.shape_cast %45 : vector<2x128xf32> to vector<2x1x128xf32>
    %64 = vector.shape_cast %51 : vector<2x128xf32> to vector<2x1x128xf32>
    %65 = vector.shape_cast %57 : vector<2x128xf32> to vector<2x1x128xf32>
    %66 = tpu.concatenate %58, %59, %60, %61, %62, %63, %64, %65 in 1 : vector<2x1x128xf32>, vector<2x1x128xf32>, vector<2x1x128xf32>, vector<2x1x128xf32>, vector<2x1x128xf32>, vector<2x1x128xf32>, vector<2x1x128xf32>, vector<2x1x128xf32> -> vector<2x8x128xf32>
    %67 = vector.shape_cast %66 : vector<2x8x128xf32> to vector<16x128xf32>
    %c0_25 = arith.constant 0 : index
    %c0_26 = arith.constant 0 : index
    %68 = vector.load %arg4[%c0_25, %c0_26] : memref<128x5xf32, #tpu.memory_space<vmem>>, vector<128x5xf32>
    %cst_27 = arith.constant dense<0.000000e+00> : vector<16x5xf32>
    %69 = tpu.matmul %67, %68, %cst_27 {dimension_numbers = #tpu.dot_dimension_numbers<[1], [0], [0], [1], [0, 0, 1, 1], [], []>} : vector<16x128xf32>, vector<128x5xf32>, vector<16x5xf32> -> vector<16x5xf32>
    %c0_28 = arith.constant 0 : index
    %c0_29 = arith.constant 0 : index
    %70 = vector.load %arg5[%c0_28, %c0_29] : memref<1x5xf32, #tpu.memory_space<vmem>>, vector<1x5xf32>
    %71 = vector.broadcast %70 : vector<1x5xf32> to vector<16x5xf32>
    %72 = arith.addf %69, %71 : vector<16x5xf32>
    %73 = vector.shape_cast %72 : vector<16x5xf32> to vector<2x8x5xf32>
    %74 = arith.negf %73 : vector<2x8x5xf32>
    %75 = math.exp %74 : vector<2x8x5xf32>
    %cst_30 = arith.constant 1.000000e+00 : f32
    %76 = vector.broadcast %cst_30 : f32 to vector<2x8x5xf32>
    %77 = arith.addf %76, %75 : vector<2x8x5xf32>
    %78 = arith.divf %76, %77 : vector<2x8x5xf32>
    %c0_31 = arith.constant 0 : index
    %c0_32 = arith.constant 0 : index
    %c0_33 = arith.constant 0 : index
    %79 = vector.load %arg6[%c0_31, %c0_32, %c0_33] : memref<2x8x5xf32, #tpu.memory_space<vmem>>, vector<2x8x5xf32>
    tpu.vector_store %arg6[%c0_31, %c0_32, %c0_33], %78 {strides = array<i32>} : memref<2x8x5xf32, #tpu.memory_space<vmem>>, vector<2x8x5xf32>,
    return
  }
}

</mosaic_0001>

<llo_original>
// kernel: identity_rnn_forward.1
$region0: #{identity_rnn_forward.1}
  #allocation0 [shape = 'u32[]', space=smem, size = 0x4, offset = 0x4, fixed_abs, tag = 'smem constant byte address 0x4 - core index']
  #allocation1 [shape = 'u32[144,128]{1,0:T(1,128)}', space=vmem, size = 0x12000, scoped, tag = 'internal scratch']
  %s0 = inlined_call_operand.vmem [shape: f32[2,8,5], index: 0, kind: input, shape index: {}]
  %s1 = inlined_call_operand.vmem [shape: f32[5,128], index: 1, kind: input, shape index: {}]
  %s2 = inlined_call_operand.vmem [shape: f32[128,128], index: 2, kind: input, shape index: {}]
  %s3 = inlined_call_operand.vmem [shape: f32[1,128], index: 3, kind: input, shape index: {}]
  %s4 = inlined_call_operand.vmem [shape: f32[128,5], index: 4, kind: input, shape index: {}]
  %s5 = inlined_call_operand.vmem [shape: f32[1,5], index: 5, kind: input, shape index: {}]
  %s6 = inlined_call_operand.vmem [shape: f32[2,8,5], index: 6, kind: output, shape index: {}]
  %s7 = sld [smem:[#allocation0]]
  $region34: #{identity_rnn_forward.1} parent=0
    _
  %s9 = ssub.s32 1, %s7
  %s10 = scalar_select 0, %s9, %s7
  // Predicated region
  $region2: #{identity_rnn_forward.1} parent=0 // pred_check
    _
  $region3: #{identity_rnn_forward.1} parent=0 // pred_check_branch
    %12 = sbr.rel (0) target = $region5
  $region4: #{identity_rnn_forward.1} parent=0 // pred_region
    _
  $region5: #{identity_rnn_forward.1} parent=0 // pred_fallthru
    _
  // Predicated region
  $region6: #{identity_rnn_forward.1} parent=0 // pred_check
    _
  $region7: #{identity_rnn_forward.1} parent=0 // pred_check_branch
    %14 = sbr.rel (0) target = $region9
  $region8: #{identity_rnn_forward.1} parent=0 // pred_region
    _
  $region9: #{identity_rnn_forward.1} parent=0 // pred_fallthru
    _
  // Predicated region
  $region10: #{identity_rnn_forward.1} parent=0 // pred_check
    _
  $region11: #{identity_rnn_forward.1} parent=0 // pred_check_branch
    %16 = sbr.rel (0) target = $region13
  $region12: #{identity_rnn_forward.1} parent=0 // pred_region
    _
  $region13: #{identity_rnn_forward.1} parent=0 // pred_fallthru
    _
  // Predicated region
  $region14: #{identity_rnn_forward.1} parent=0 // pred_check
    _
  $region15: #{identity_rnn_forward.1} parent=0 // pred_check_branch
    %18 = sbr.rel (0) target = $region17
  $region16: #{identity_rnn_forward.1} parent=0 // pred_region
    _
  $region17: #{identity_rnn_forward.1} parent=0 // pred_fallthru
    _
  // Predicated region
  $region18: #{identity_rnn_forward.1} parent=0 // pred_check
    _
  $region19: #{identity_rnn_forward.1} parent=0 // pred_check_branch
    %20 = sbr.rel (0) target = $region21
  $region20: #{identity_rnn_forward.1} parent=0 // pred_region
    _
  $region21: #{identity_rnn_forward.1} parent=0 // pred_fallthru
    _
  // Predicated region
  $region22: #{identity_rnn_forward.1} parent=0 // pred_check
    _
  $region23: #{identity_rnn_forward.1} parent=0 // pred_check_branch
    %22 = sbr.rel (0) target = $region25
  $region24: #{identity_rnn_forward.1} parent=0 // pred_region
    _
  $region25: #{identity_rnn_forward.1} parent=0 // pred_fallthru
    _
  %v23 = vld [vmem:[%s0] sm:$0xff]
  %v24 = vld [vmem:[%s0 + $0x8] sm:$0xff]
  %v25 = vld [vmem:[%s2] sm:$0xff]
  %v26 = vld [vmem:[%s2 + $0x8] sm:$0xff]
  %v27 = vld [vmem:[%s2 + $0x10] sm:$0xff]
  %v28 = vld [vmem:[%s2 + $0x18] sm:$0xff]
  %v29 = vld [vmem:[%s2 + $0x20] sm:$0xff]
  %v30 = vld [vmem:[%s2 + $0x28] sm:$0xff]
  %v31 = vld [vmem:[%s2 + $0x30] sm:$0xff]
  %v32 = vld [vmem:[%s2 + $0x38] sm:$0xff]
  %v33 = vld [vmem:[%s2 + $0x40] sm:$0xff]
  %v34 = vld [vmem:[%s2 + $0x48] sm:$0xff]
  %v35 = vld [vmem:[%s2 + $0x50] sm:$0xff]
  %v36 = vld [vmem:[%s2 + $0x58] sm:$0xff]
  %v37 = vld [vmem:[%s2 + $0x60] sm:$0xff]
  %v38 = vld [vmem:[%s2 + $0x68] sm:$0xff]
  %v39 = vld [vmem:[%s2 + $0x70] sm:$0xff]
  %v40 = vld [vmem:[%s2 + $0x78] sm:$0xff]
  %v41 = vld [vmem:[%s1] sm:$0x1f]
  %v42 = vld [vmem:[%s3] sm:$0x1]
  %v44 = vlaneseq
  %v45 = vshrl.u32 %v44, 7
  %v46 = vsub.s32 0, %v45
  %v47 = vrot.slane %v42, %v46
  %vm49 = vcmask 39936
  %v51 = vsel %vm49, %v23, 0
  %v54 = vsel %vm49, %v24, 0
  %vm56 = vcmask 1044480
  %v58 = vsel %vm56, %v41, 0
  %60 = vmatprep.subr.mxu0 0.0
  %61 = vmatpush1.msra.mxu0 0.0
  %62 = vmatprep.subr.mxu0 0.0
  %63 = vmatpush1.msra.mxu0 0.0
  %64 = vmatprep.subr.mxu0 0.0
  %65 = vmatpush1.msra.mxu0 0.0
  %66 = vmatprep.subr.mxu0 0.0
  %67 = vmatpush1.msra.mxu0 0.0
  %68 = vmatprep.subr.mxu0 0.0
  %69 = vmatpush1.msra.mxu0 0.0
  %70 = vmatprep.subr.mxu0 0.0
  %71 = vmatpush1.msra.mxu0 0.0
  %72 = vmatprep.subr.mxu0 0.0
  %73 = vmatpush1.msra.mxu0 0.0
  %74 = vmatprep.subr.mxu0 0.0
  %75 = vmatpush1.msra.mxu0 0.0
  %76 = vmatprep.subr.mxu0 0.0
  %77 = vmatpush1.msra.mxu0 0.0
  %78 = vmatprep.subr.mxu0 0.0
  %79 = vmatpush1.msra.mxu0 0.0
  %80 = vmatprep.subr.mxu0 0.0
  %81 = vmatpush1.msra.mxu0 0.0
  %82 = vmatprep.subr.mxu0 0.0
  %83 = vmatpush1.msra.mxu0 0.0
  %84 = vmatprep.subr.mxu0 0.0
  %85 = vmatpush1.msra.mxu0 0.0
  %86 = vmatprep.subr.mxu0 0.0
  %87 = vmatpush1.msra.mxu0 0.0
  %88 = vmatprep.subr.mxu0 0.0
  %89 = vmatpush1.msra.mxu0 0.0
  %90 = vmatprep.subr.mxu0 0.0
  %91 = vmatpush1.msra.mxu0 %v58
  %92 = vmatprep.subr.mxu0 0.0
  %93 = vmatpush2.msra.mxu0 0.0
  %94 = vmatprep.subr.mxu0 0.0
  %95 = vmatpush2.msra.mxu0 0.0
  %96 = vmatprep.subr.mxu0 0.0
  %97 = vmatpush2.msra.mxu0 0.0
  %98 = vmatprep.subr.mxu0 0.0
  %99 = vmatpush2.msra.mxu0 0.0
  %100 = vmatprep.subr.mxu0 0.0
  %101 = vmatpush2.msra.mxu0 0.0
  %102 = vmatprep.subr.mxu0 0.0
  %103 = vmatpush2.msra.mxu0 0.0
  %104 = vmatprep.subr.mxu0 0.0
  %105 = vmatpush2.msra.mxu0 0.0
  %106 = vmatprep.subr.mxu0 0.0
  %107 = vmatpush2.msra.mxu0 0.0
  %108 = vmatprep.subr.mxu0 0.0
  %109 = vmatpush2.msra.mxu0 0.0
  %110 = vmatprep.subr.mxu0 0.0
  %111 = vmatpush2.msra.mxu0 0.0
  %112 = vmatprep.subr.mxu0 0.0
  %113 = vmatpush2.msra.mxu0 0.0
  %114 = vmatprep.subr.mxu0 0.0
  %115 = vmatpush2.msra.mxu0 0.0
  %116 = vmatprep.subr.mxu0 0.0
  %117 = vmatpush2.msra.mxu0 0.0
  %118 = vmatprep.subr.mxu0 0.0
  %119 = vmatpush2.msra.mxu0 0.0
  %120 = vmatprep.subr.mxu0 0.0
  %121 = vmatpush2.msra.mxu0 0.0
  %122 = vmatprep.subr.mxu0 0.0
  %123 = vmatpush2.msra.mxu0 0.0
  %124 = vmatprep.mubr.f32.mxu0 0.0
  %125 = vmatmul.mubr.f32.gmra.mxu0 %v51
  %v126 = vpop.f32.mrf.mxu0
  %v127 = vadd.f32 %v47, %v126
  %v128 = vpop.f32.mrf.mxu0
  %129 = vmatprep.mubr.f32.mxu0 0.0
  %130 = vmatmul.mubr.f32.gmra.mxu0 %v54
  %v131 = vpop.f32.mrf.mxu0
  %v132 = vadd.f32 %v47, %v131
  %v133 = vpop.f32.mrf.mxu0
  %134 = vdwg.mxu0
  %135 = vmatprep.subr.mxu0 0.0
  %136 = vmatpush1.msra.mxu0 %v40
  %137 = vmatprep.subr.mxu0 0.0
  %138 = vmatpush1.msra.mxu0 %v39
  %139 = vmatprep.subr.mxu0 0.0
  %140 = vmatpush1.msra.mxu0 %v38
  %141 = vmatprep.subr.mxu0 0.0
  %142 = vmatpush1.msra.mxu0 %v37
  %143 = vmatprep.subr.mxu0 0.0
  %144 = vmatpush1.msra.mxu0 %v36
  %145 = vmatprep.subr.mxu0 0.0
  %146 = vmatpush1.msra.mxu0 %v35
  %147 = vmatprep.subr.mxu0 0.0
  %148 = vmatpush1.msra.mxu0 %v34
  %149 = vmatprep.subr.mxu0 0.0
  %150 = vmatpush1.msra.mxu0 %v33
  %151 = vmatprep.subr.mxu0 0.0
  %152 = vmatpush1.msra.mxu0 %v32
  %153 = vmatprep.subr.mxu0 0.0
  %154 = vmatpush1.msra.mxu0 %v31
  %155 = vmatprep.subr.mxu0 0.0
  %156 = vmatpush1.msra.mxu0 %v30
  %157 = vmatprep.subr.mxu0 0.0
  %158 = vmatpush1.msra.mxu0 %v29
  %159 = vmatprep.subr.mxu0 0.0
  %160 = vmatpush1.msra.mxu0 %v28
  %161 = vmatprep.subr.mxu0 0.0
  %162 = vmatpush1.msra.mxu0 %v27
  %163 = vmatprep.subr.mxu0 0.0
  %164 = vmatpush1.msra.mxu0 %v26
  %165 = vmatprep.subr.mxu0 0.0
  %166 = vmatpush1.msra.mxu0 %v25
  %167 = vmatprep.subr.mxu0 0.0
  %168 = vmatpush2.msra.mxu0 0.0
  %169 = vmatprep.subr.mxu0 0.0
  %170 = vmatpush2.msra.mxu0 0.0
  %171 = vmatprep.subr.mxu0 0.0
  %172 = vmatpush2.msra.mxu0 0.0
  %173 = vmatprep.subr.mxu0 0.0
  %174 = vmatpush2.msra.mxu0 0.0
  %175 = vmatprep.subr.mxu0 0.0
  %176 = vmatpush2.msra.mxu0 0.0
  %177 = vmatprep.subr.mxu0 0.0
  %178 = vmatpush2.msra.mxu0 0.0
  %179 = vmatprep.subr.mxu0 0.0
  %180 = vmatpush2.msra.mxu0 0.0
  %181 = vmatprep.subr.mxu0 0.0
  %182 = vmatpush2.msra.mxu0 0.0
  %183 = vmatprep.subr.mxu0 0.0
  %184 = vmatpush2.msra.mxu0 0.0
  %185 = vmatprep.subr.mxu0 0.0
  %186 = vmatpush2.msra.mxu0 0.0
  %187 = vmatprep.subr.mxu0 0.0
  %188 = vmatpush2.msra.mxu0 0.0
  %189 = vmatprep.subr.mxu0 0.0
  %190 = vmatpush2.msra.mxu0 0.0
  %191 = vmatprep.subr.mxu0 0.0
  %192 = vmatpush2.msra.mxu0 0.0
  %193 = vmatprep.subr.mxu0 0.0
  %194 = vmatpush2.msra.mxu0 0.0
  %195 = vmatprep.subr.mxu0 0.0
  %196 = vmatpush2.msra.mxu0 0.0
  %197 = vmatprep.subr.mxu0 0.0
  %198 = vmatpush2.msra.mxu0 0.0
  %199 = vmatprep.mubr.f32.mxu0 0.0
  %200 = vmatmul.mubr.f32.gmra.mxu0 0.0
  %v201 = vpop.f32.mrf.mxu0
  %v202 = vadd.f32 0.0, %v201
  %v203 = vpop.f32.mrf.mxu0
  %204 = vdwg.mxu0
  %v206 = vrot.slane %v202, 1
  %v209 = vadd.f32 %v127, %v202
  %v210 = vadd.f32 %v132, %v206
  %v211 = vmax.f32 %v209, 0.0
  %v212 = vmax.f32 %v210, 0.0
  %v215 = vrot.slane %v212, 7
  %vm216 = vcmask 1041409
  %v217 = vsel %vm216, %v215, %v211
  %219 = vmatprep.subr.mxu0 0.0
  %220 = vmatpush1.msra.mxu0 %v40
  %221 = vmatprep.subr.mxu0 0.0
  %222 = vmatpush1.msra.mxu0 %v39
  %223 = vmatprep.subr.mxu0 0.0
  %224 = vmatpush1.msra.mxu0 %v38
  %225 = vmatprep.subr.mxu0 0.0
  %226 = vmatpush1.msra.mxu0 %v37
  %227 = vmatprep.subr.mxu0 0.0
  %228 = vmatpush1.msra.mxu0 %v36
  %229 = vmatprep.subr.mxu0 0.0
  %230 = vmatpush1.msra.mxu0 %v35
  %231 = vmatprep.subr.mxu0 0.0
  %232 = vmatpush1.msra.mxu0 %v34
  %233 = vmatprep.subr.mxu0 0.0
  %234 = vmatpush1.msra.mxu0 %v33
  %235 = vmatprep.subr.mxu0 0.0
  %236 = vmatpush1.msra.mxu0 %v32
  %237 = vmatprep.subr.mxu0 0.0
  %238 = vmatpush1.msra.mxu0 %v31
  %239 = vmatprep.subr.mxu0 0.0
  %240 = vmatpush1.msra.mxu0 %v30
  %241 = vmatprep.subr.mxu0 0.0
  %242 = vmatpush1.msra.mxu0 %v29
  %243 = vmatprep.subr.mxu0 0.0
  %244 = vmatpush1.msra.mxu0 %v28
  %245 = vmatprep.subr.mxu0 0.0
  %246 = vmatpush1.msra.mxu0 %v27
  %247 = vmatprep.subr.mxu0 0.0
  %248 = vmatpush1.msra.mxu0 %v26
  %249 = vmatprep.subr.mxu0 0.0
  %250 = vmatpush1.msra.mxu0 %v25
  %251 = vmatprep.subr.mxu0 0.0
  %252 = vmatpush2.msra.mxu0 0.0
  %253 = vmatprep.subr.mxu0 0.0
  %254 = vmatpush2.msra.mxu0 0.0
  %255 = vmatprep.subr.mxu0 0.0
  %256 = vmatpush2.msra.mxu0 0.0
  %257 = vmatprep.subr.mxu0 0.0
  %258 = vmatpush2.msra.mxu0 0.0
  %259 = vmatprep.subr.mxu0 0.0
  %260 = vmatpush2.msra.mxu0 0.0
  %261 = vmatprep.subr.mxu0 0.0
  %262 = vmatpush2.msra.mxu0 0.0
  %263 = vmatprep.subr.mxu0 0.0
  %264 = vmatpush2.msra.mxu0 0.0
  %265 = vmatprep.subr.mxu0 0.0
  %266 = vmatpush2.msra.mxu0 0.0
  %267 = vmatprep.subr.mxu0 0.0
  %268 = vmatpush2.msra.mxu0 0.0
  %269 = vmatprep.subr.mxu0 0.0
  %270 = vmatpush2.msra.mxu0 0.0
  %271 = vmatprep.subr.mxu0 0.0
  %272 = vmatpush2.msra.mxu0 0.0
  %273 = vmatprep.subr.mxu0 0.0
  %274 = vmatpush2.msra.mxu0 0.0
  %275 = vmatprep.subr.mxu0 0.0
  %276 = vmatpush2.msra.mxu0 0.0
  %277 = vmatprep.subr.mxu0 0.0
  %278 = vmatpush2.msra.mxu0 0.0
  %279 = vmatprep.subr.mxu0 0.0
  %280 = vmatpush2.msra.mxu0 0.0
  %281 = vmatprep.subr.mxu0 0.0
  %282 = vmatpush2.msra.mxu0 0.0
  %283 = vmatprep.mubr.f32.mxu0 0.0
  %284 = vmatmul.mubr.f32.gmra.mxu0 %v217
  %v285 = vpop.f32.mrf.mxu0
  %v286 = vadd.f32 0.0, %v285
  %v287 = vpop.f32.mrf.mxu0
  %288 = vdwg.mxu0
  %v290 = vrot.slane %v286, 7
  %v293 = vadd.f32 %v127, %v290
  %v294 = vadd.f32 %v132, %v286
  %v295 = vmax.f32 %v293, 0.0
  %v296 = vmax.f32 %v294, 0.0
  %v299 = vrot.slane %v295, 1
  %v300 = vsel %vm216, %v296, %v299
  %302 = vmatprep.subr.mxu0 0.0
  %303 = vmatpush1.msra.mxu0 %v40
  %304 = vmatprep.subr.mxu0 0.0
  %305 = vmatpush1.msra.mxu0 %v39
  %306 = vmatprep.subr.mxu0 0.0
  %307 = vmatpush1.msra.mxu0 %v38
  %308 = vmatprep.subr.mxu0 0.0
  %309 = vmatpush1.msra.mxu0 %v37
  %310 = vmatprep.subr.mxu0 0.0
  %311 = vmatpush1.msra.mxu0 %v36
  %312 = vmatprep.subr.mxu0 0.0
  %313 = vmatpush1.msra.mxu0 %v35
  %314 = vmatprep.subr.mxu0 0.0
  %315 = vmatpush1.msra.mxu0 %v34
  %316 = vmatprep.subr.mxu0 0.0
  %317 = vmatpush1.msra.mxu0 %v33
  %318 = vmatprep.subr.mxu0 0.0
  %319 = vmatpush1.msra.mxu0 %v32
  %320 = vmatprep.subr.mxu0 0.0
  %321 = vmatpush1.msra.mxu0 %v31
  %322 = vmatprep.subr.mxu0 0.0
  %323 = vmatpush1.msra.mxu0 %v30
  %324 = vmatprep.subr.mxu0 0.0
  %325 = vmatpush1.msra.mxu0 %v29
  %326 = vmatprep.subr.mxu0 0.0
  %327 = vmatpush1.msra.mxu0 %v28
  %328 = vmatprep.subr.mxu0 0.0
  %329 = vmatpush1.msra.mxu0 %v27
  %330 = vmatprep.subr.mxu0 0.0
  %331 = vmatpush1.msra.mxu0 %v26
  %332 = vmatprep.subr.mxu0 0.0
  %333 = vmatpush1.msra.mxu0 %v25
  %334 = vmatprep.subr.mxu0 0.0
  %335 = vmatpush2.msra.mxu0 0.0
  %336 = vmatprep.subr.mxu0 0.0
  %337 = vmatpush2.msra.mxu0 0.0
  %338 = vmatprep.subr.mxu0 0.0
  %339 = vmatpush2.msra.mxu0 0.0
  %340 = vmatprep.subr.mxu0 0.0
  %341 = vmatpush2.msra.mxu0 0.0
  %342 = vmatprep.subr.mxu0 0.0
  %343 = vmatpush2.msra.mxu0 0.0
  %344 = vmatprep.subr.mxu0 0.0
  %345 = vmatpush2.msra.mxu0 0.0
  %346 = vmatprep.subr.mxu0 0.0
  %347 = vmatpush2.msra.mxu0 0.0
  %348 = vmatprep.subr.mxu0 0.0
  %349 = vmatpush2.msra.mxu0 0.0
  %350 = vmatprep.subr.mxu0 0.0
  %351 = vmatpush2.msra.mxu0 0.0
  %352 = vmatprep.subr.mxu0 0.0
  %353 = vmatpush2.msra.mxu0 0.0
  %354 = vmatprep.subr.mxu0 0.0
  %355 = vmatpush2.msra.mxu0 0.0
  %356 = vmatprep.subr.mxu0 0.0
  %357 = vmatpush2.msra.mxu0 0.0
  %358 = vmatprep.subr.mxu0 0.0
  %359 = vmatpush2.msra.mxu0 0.0
  %360 = vmatprep.subr.mxu0 0.0
  %361 = vmatpush2.msra.mxu0 0.0
  %362 = vmatprep.subr.mxu0 0.0
  %363 = vmatpush2.msra.mxu0 0.0
  %364 = vmatprep.subr.mxu0 0.0
  %365 = vmatpush2.msra.mxu0 0.0
  %366 = vmatprep.mubr.f32.mxu0 0.0
  %367 = vmatmul.mubr.f32.gmra.mxu0 %v300
  %v368 = vpop.f32.mrf.mxu0
  %v369 = vadd.f32 0.0, %v368
  %v370 = vpop.f32.mrf.mxu0
  %371 = vdwg.mxu0
  %v373 = vrot.slane %v369, 6
  %v374 = vrot.slane %v369, 7
  %v377 = vadd.f32 %v127, %v373
  %v378 = vadd.f32 %v132, %v374
  %v379 = vmax.f32 %v377, 0.0
  %v380 = vmax.f32 %v378, 0.0
  %v383 = vrot.slane %v379, 2
  %v384 = vrot.slane %v380, 1
  %v385 = vsel %vm216, %v384, %v383
  %387 = vmatprep.subr.mxu0 0.0
  %388 = vmatpush1.msra.mxu0 %v40
  %389 = vmatprep.subr.mxu0 0.0
  %390 = vmatpush1.msra.mxu0 %v39
  %391 = vmatprep.subr.mxu0 0.0
  %392 = vmatpush1.msra.mxu0 %v38
  %393 = vmatprep.subr.mxu0 0.0
  %394 = vmatpush1.msra.mxu0 %v37
  %395 = vmatprep.subr.mxu0 0.0
  %396 = vmatpush1.msra.mxu0 %v36
  %397 = vmatprep.subr.mxu0 0.0
  %398 = vmatpush1.msra.mxu0 %v35
  %399 = vmatprep.subr.mxu0 0.0
  %400 = vmatpush1.msra.mxu0 %v34
  %401 = vmatprep.subr.mxu0 0.0
  %402 = vmatpush1.msra.mxu0 %v33
  %403 = vmatprep.subr.mxu0 0.0
  %404 = vmatpush1.msra.mxu0 %v32
  %405 = vmatprep.subr.mxu0 0.0
  %406 = vmatpush1.msra.mxu0 %v31
  %407 = vmatprep.subr.mxu0 0.0
  %408 = vmatpush1.msra.mxu0 %v30
  %409 = vmatprep.subr.mxu0 0.0
  %410 = vmatpush1.msra.mxu0 %v29
  %411 = vmatprep.subr.mxu0 0.0
  %412 = vmatpush1.msra.mxu0 %v28
  %413 = vmatprep.subr.mxu0 0.0
  %414 = vmatpush1.msra.mxu0 %v27
  %415 = vmatprep.subr.mxu0 0.0
  %416 = vmatpush1.msra.mxu0 %v26
  %417 = vmatprep.subr.mxu0 0.0
  %418 = vmatpush1.msra.mxu0 %v25
  %419 = vmatprep.subr.mxu0 0.0
  %420 = vmatpush2.msra.mxu0 0.0
  %421 = vmatprep.subr.mxu0 0.0
  %422 = vmatpush2.msra.mxu0 0.0
  %423 = vmatprep.subr.mxu0 0.0
  %424 = vmatpush2.msra.mxu0 0.0
  %425 = vmatprep.subr.mxu0 0.0
  %426 = vmatpush2.msra.mxu0 0.0
  %427 = vmatprep.subr.mxu0 0.0
  %428 = vmatpush2.msra.mxu0 0.0
  %429 = vmatprep.subr.mxu0 0.0
  %430 = vmatpush2.msra.mxu0 0.0
  %431 = vmatprep.subr.mxu0 0.0
  %432 = vmatpush2.msra.mxu0 0.0
  %433 = vmatprep.subr.mxu0 0.0
  %434 = vmatpush2.msra.mxu0 0.0
  %435 = vmatprep.subr.mxu0 0.0
  %436 = vmatpush2.msra.mxu0 0.0
  %437 = vmatprep.subr.mxu0 0.0
  %438 = vmatpush2.msra.mxu0 0.0
  %439 = vmatprep.subr.mxu0 0.0
  %440 = vmatpush2.msra.mxu0 0.0
  %441 = vmatprep.subr.mxu0 0.0
  %442 = vmatpush2.msra.mxu0 0.0
  %443 = vmatprep.subr.mxu0 0.0
  %444 = vmatpush2.msra.mxu0 0.0
  %445 = vmatprep.subr.mxu0 0.0
  %446 = vmatpush2.msra.mxu0 0.0
  %447 = vmatprep.subr.mxu0 0.0
  %448 = vmatpush2.msra.mxu0 0.0
  %449 = vmatprep.subr.mxu0 0.0
  %450 = vmatpush2.msra.mxu0 0.0
  %451 = vmatprep.mubr.f32.mxu0 0.0
  %452 = vmatmul.mubr.f32.gmra.mxu0 %v385
  %v453 = vpop.f32.mrf.mxu0
  %v454 = vadd.f32 0.0, %v453
  %v455 = vpop.f32.mrf.mxu0
  %456 = vdwg.mxu0
  %v458 = vrot.slane %v454, 5
  %v459 = vrot.slane %v454, 6
  %v462 = vadd.f32 %v127, %v458
  %v463 = vadd.f32 %v132, %v459
  %v464 = vmax.f32 %v462, 0.0
  %v465 = vmax.f32 %v463, 0.0
  %v468 = vrot.slane %v464, 3
  %v469 = vrot.slane %v465, 2
  %v470 = vsel %vm216, %v469, %v468
  %472 = vmatprep.subr.mxu0 0.0
  %473 = vmatpush1.msra.mxu0 %v40
  %474 = vmatprep.subr.mxu0 0.0
  %475 = vmatpush1.msra.mxu0 %v39
  %476 = vmatprep.subr.mxu0 0.0
  %477 = vmatpush1.msra.mxu0 %v38
  %478 = vmatprep.subr.mxu0 0.0
  %479 = vmatpush1.msra.mxu0 %v37
  %480 = vmatprep.subr.mxu0 0.0
  %481 = vmatpush1.msra.mxu0 %v36
  %482 = vmatprep.subr.mxu0 0.0
  %483 = vmatpush1.msra.mxu0 %v35
  %484 = vmatprep.subr.mxu0 0.0
  %485 = vmatpush1.msra.mxu0 %v34
  %486 = vmatprep.subr.mxu0 0.0
  %487 = vmatpush1.msra.mxu0 %v33
  %488 = vmatprep.subr.mxu0 0.0
  %489 = vmatpush1.msra.mxu0 %v32
  %490 = vmatprep.subr.mxu0 0.0
  %491 = vmatpush1.msra.mxu0 %v31
  %492 = vmatprep.subr.mxu0 0.0
  %493 = vmatpush1.msra.mxu0 %v30
  %494 = vmatprep.subr.mxu0 0.0
  %495 = vmatpush1.msra.mxu0 %v29
  %496 = vmatprep.subr.mxu0 0.0
  %497 = vmatpush1.msra.mxu0 %v28
  %498 = vmatprep.subr.mxu0 0.0
  %499 = vmatpush1.msra.mxu0 %v27
  %500 = vmatprep.subr.mxu0 0.0
  %501 = vmatpush1.msra.mxu0 %v26
  %502 = vmatprep.subr.mxu0 0.0
  %503 = vmatpush1.msra.mxu0 %v25
  %504 = vmatprep.subr.mxu0 0.0
  %505 = vmatpush2.msra.mxu0 0.0
  %506 = vmatprep.subr.mxu0 0.0
  %507 = vmatpush2.msra.mxu0 0.0
  %508 = vmatprep.subr.mxu0 0.0
  %509 = vmatpush2.msra.mxu0 0.0
  %510 = vmatprep.subr.mxu0 0.0
  %511 = vmatpush2.msra.mxu0 0.0
  %512 = vmatprep.subr.mxu0 0.0
  %513 = vmatpush2.msra.mxu0 0.0
  %514 = vmatprep.subr.mxu0 0.0
  %515 = vmatpush2.msra.mxu0 0.0
  %516 = vmatprep.subr.mxu0 0.0
  %517 = vmatpush2.msra.mxu0 0.0
  %518 = vmatprep.subr.mxu0 0.0
  %519 = vmatpush2.msra.mxu0 0.0
  %520 = vmatprep.subr.mxu0 0.0
  %521 = vmatpush2.msra.mxu0 0.0
  %522 = vmatprep.subr.mxu0 0.0
  %523 = vmatpush2.msra.mxu0 0.0
  %524 = vmatprep.subr.mxu0 0.0
  %525 = vmatpush2.msra.mxu0 0.0
  %526 = vmatprep.subr.mxu0 0.0
  %527 = vmatpush2.msra.mxu0 0.0
  %528 = vmatprep.subr.mxu0 0.0
  %529 = vmatpush2.msra.mxu0 0.0
  %530 = vmatprep.subr.mxu0 0.0
  %531 = vmatpush2.msra.mxu0 0.0
  %532 = vmatprep.subr.mxu0 0.0
  %533 = vmatpush2.msra.mxu0 0.0
  %534 = vmatprep.subr.mxu0 0.0
  %535 = vmatpush2.msra.mxu0 0.0
  %536 = vmatprep.mubr.f32.mxu0 0.0
  %537 = vmatmul.mubr.f32.gmra.mxu0 %v470
  %v538 = vpop.f32.mrf.mxu0
  %v539 = vadd.f32 0.0, %v538
  %v540 = vpop.f32.mrf.mxu0
  %541 = vdwg.mxu0
  %v543 = vrot.slane %v539, 4
  %v544 = vrot.slane %v539, 5
  %v547 = vadd.f32 %v127, %v543
  %v548 = vadd.f32 %v132, %v544
  %v549 = vmax.f32 %v547, 0.0
  %v550 = vmax.f32 %v548, 0.0
  %v553 = vrot.slane %v549, 4
  %v554 = vrot.slane %v550, 3
  %v555 = vsel %vm216, %v554, %v553
  %557 = vmatprep.subr.mxu0 0.0
  %558 = vmatpush1.msra.mxu0 %v40
  %559 = vmatprep.subr.mxu0 0.0
  %560 = vmatpush1.msra.mxu0 %v39
  %561 = vmatprep.subr.mxu0 0.0
  %562 = vmatpush1.msra.mxu0 %v38
  %563 = vmatprep.subr.mxu0 0.0
  %564 = vmatpush1.msra.mxu0 %v37
  %565 = vmatprep.subr.mxu0 0.0
  %566 = vmatpush1.msra.mxu0 %v36
  %567 = vmatprep.subr.mxu0 0.0
  %568 = vmatpush1.msra.mxu0 %v35
  %569 = vmatprep.subr.mxu0 0.0
  %570 = vmatpush1.msra.mxu0 %v34
  %571 = vmatprep.subr.mxu0 0.0
  %572 = vmatpush1.msra.mxu0 %v33
  %573 = vmatprep.subr.mxu0 0.0
  %574 = vmatpush1.msra.mxu0 %v32
  %575 = vmatprep.subr.mxu0 0.0
  %576 = vmatpush1.msra.mxu0 %v31
  %577 = vmatprep.subr.mxu0 0.0
  %578 = vmatpush1.msra.mxu0 %v30
  %579 = vmatprep.subr.mxu0 0.0
  %580 = vmatpush1.msra.mxu0 %v29
  %581 = vmatprep.subr.mxu0 0.0
  %582 = vmatpush1.msra.mxu0 %v28
  %583 = vmatprep.subr.mxu0 0.0
  %584 = vmatpush1.msra.mxu0 %v27
  %585 = vmatprep.subr.mxu0 0.0
  %586 = vmatpush1.msra.mxu0 %v26
  %587 = vmatprep.subr.mxu0 0.0
  %588 = vmatpush1.msra.mxu0 %v25
  %589 = vmatprep.subr.mxu0 0.0
  %590 = vmatpush2.msra.mxu0 0.0
  %591 = vmatprep.subr.mxu0 0.0
  %592 = vmatpush2.msra.mxu0 0.0
  %593 = vmatprep.subr.mxu0 0.0
  %594 = vmatpush2.msra.mxu0 0.0
  %595 = vmatprep.subr.mxu0 0.0
  %596 = vmatpush2.msra.mxu0 0.0
  %597 = vmatprep.subr.mxu0 0.0
  %598 = vmatpush2.msra.mxu0 0.0
  %599 = vmatprep.subr.mxu0 0.0
  %600 = vmatpush2.msra.mxu0 0.0
  %601 = vmatprep.subr.mxu0 0.0
  %602 = vmatpush2.msra.mxu0 0.0
  %603 = vmatprep.subr.mxu0 0.0
  %604 = vmatpush2.msra.mxu0 0.0
  %605 = vmatprep.subr.mxu0 0.0
  %606 = vmatpush2.msra.mxu0 0.0
  %607 = vmatprep.subr.mxu0 0.0
  %608 = vmatpush2.msra.mxu0 0.0
  %609 = vmatprep.subr.mxu0 0.0
  %610 = vmatpush2.msra.mxu0 0.0
  %611 = vmatprep.subr.mxu0 0.0
  %612 = vmatpush2.msra.mxu0 0.0
  %613 = vmatprep.subr.mxu0 0.0
  %614 = vmatpush2.msra.mxu0 0.0
  %615 = vmatprep.subr.mxu0 0.0
  %616 = vmatpush2.msra.mxu0 0.0
  %617 = vmatprep.subr.mxu0 0.0
  %618 = vmatpush2.msra.mxu0 0.0
  %619 = vmatprep.subr.mxu0 0.0
  %620 = vmatpush2.msra.mxu0 0.0
  %621 = vmatprep.mubr.f32.mxu0 0.0
  %622 = vmatmul.mubr.f32.gmra.mxu0 %v555
  %v623 = vpop.f32.mrf.mxu0
  %v624 = vadd.f32 0.0, %v623
  %v625 = vpop.f32.mrf.mxu0
  %626 = vdwg.mxu0
  %v628 = vrot.slane %v624, 3
  %v629 = vrot.slane %v624, 4
  %v632 = vadd.f32 %v127, %v628
  %v633 = vadd.f32 %v132, %v629
  %v634 = vmax.f32 %v632, 0.0
  %v635 = vmax.f32 %v633, 0.0
  %v638 = vrot.slane %v634, 5
  %v639 = vrot.slane %v635, 4
  %v640 = vsel %vm216, %v639, %v638
  %642 = vmatprep.subr.mxu0 0.0
  %643 = vmatpush1.msra.mxu0 %v40
  %644 = vmatprep.subr.mxu0 0.0
  %645 = vmatpush1.msra.mxu0 %v39
  %646 = vmatprep.subr.mxu0 0.0
  %647 = vmatpush1.msra.mxu0 %v38
  %648 = vmatprep.subr.mxu0 0.0
  %649 = vmatpush1.msra.mxu0 %v37
  %650 = vmatprep.subr.mxu0 0.0
  %651 = vmatpush1.msra.mxu0 %v36
  %652 = vmatprep.subr.mxu0 0.0
  %653 = vmatpush1.msra.mxu0 %v35
  %654 = vmatprep.subr.mxu0 0.0
  %655 = vmatpush1.msra.mxu0 %v34
  %656 = vmatprep.subr.mxu0 0.0
  %657 = vmatpush1.msra.mxu0 %v33
  %658 = vmatprep.subr.mxu0 0.0
  %659 = vmatpush1.msra.mxu0 %v32
  %660 = vmatprep.subr.mxu0 0.0
  %661 = vmatpush1.msra.mxu0 %v31
  %662 = vmatprep.subr.mxu0 0.0
  %663 = vmatpush1.msra.mxu0 %v30
  %664 = vmatprep.subr.mxu0 0.0
  %665 = vmatpush1.msra.mxu0 %v29
  %666 = vmatprep.subr.mxu0 0.0
  %667 = vmatpush1.msra.mxu0 %v28
  %668 = vmatprep.subr.mxu0 0.0
  %669 = vmatpush1.msra.mxu0 %v27
  %670 = vmatprep.subr.mxu0 0.0
  %671 = vmatpush1.msra.mxu0 %v26
  %672 = vmatprep.subr.mxu0 0.0
  %673 = vmatpush1.msra.mxu0 %v25
  %674 = vmatprep.subr.mxu0 0.0
  %675 = vmatpush2.msra.mxu0 0.0
  %676 = vmatprep.subr.mxu0 0.0
  %677 = vmatpush2.msra.mxu0 0.0
  %678 = vmatprep.subr.mxu0 0.0
  %679 = vmatpush2.msra.mxu0 0.0
  %680 = vmatprep.subr.mxu0 0.0
  %681 = vmatpush2.msra.mxu0 0.0
  %682 = vmatprep.subr.mxu0 0.0
  %683 = vmatpush2.msra.mxu0 0.0
  %684 = vmatprep.subr.mxu0 0.0
  %685 = vmatpush2.msra.mxu0 0.0
  %686 = vmatprep.subr.mxu0 0.0
  %687 = vmatpush2.msra.mxu0 0.0
  %688 = vmatprep.subr.mxu0 0.0
  %689 = vmatpush2.msra.mxu0 0.0
  %690 = vmatprep.subr.mxu0 0.0
  %691 = vmatpush2.msra.mxu0 0.0
  %692 = vmatprep.subr.mxu0 0.0
  %693 = vmatpush2.msra.mxu0 0.0
  %694 = vmatprep.subr.mxu0 0.0
  %695 = vmatpush2.msra.mxu0 0.0
  %696 = vmatprep.subr.mxu0 0.0
  %697 = vmatpush2.msra.mxu0 0.0
  %698 = vmatprep.subr.mxu0 0.0
  %699 = vmatpush2.msra.mxu0 0.0
  %700 = vmatprep.subr.mxu0 0.0
  %701 = vmatpush2.msra.mxu0 0.0
  %702 = vmatprep.subr.mxu0 0.0
  %703 = vmatpush2.msra.mxu0 0.0
  %704 = vmatprep.subr.mxu0 0.0
  %705 = vmatpush2.msra.mxu0 0.0
  %706 = vmatprep.mubr.f32.mxu0 0.0
  %707 = vmatmul.mubr.f32.gmra.mxu0 %v640
  %v708 = vpop.f32.mrf.mxu0
  %v709 = vadd.f32 0.0, %v708
  %v710 = vpop.f32.mrf.mxu0
  %711 = vdwg.mxu0
  %v713 = vrot.slane %v709, 2
  %v714 = vrot.slane %v709, 3
  %v717 = vadd.f32 %v127, %v713
  %v718 = vadd.f32 %v132, %v714
  %v719 = vmax.f32 %v717, 0.0
  %v720 = vmax.f32 %v718, 0.0
  %v723 = vrot.slane %v719, 6
  %v724 = vrot.slane %v720, 5
  %v725 = vsel %vm216, %v724, %v723
  %727 = vmatprep.subr.mxu0 0.0
  %728 = vmatpush1.msra.mxu0 %v40
  %729 = vmatprep.subr.mxu0 0.0
  %730 = vmatpush1.msra.mxu0 %v39
  %731 = vmatprep.subr.mxu0 0.0
  %732 = vmatpush1.msra.mxu0 %v38
  %733 = vmatprep.subr.mxu0 0.0
  %734 = vmatpush1.msra.mxu0 %v37
  %735 = vmatprep.subr.mxu0 0.0
  %736 = vmatpush1.msra.mxu0 %v36
  %737 = vmatprep.subr.mxu0 0.0
  %738 = vmatpush1.msra.mxu0 %v35
  %739 = vmatprep.subr.mxu0 0.0
  %740 = vmatpush1.msra.mxu0 %v34
  %741 = vmatprep.subr.mxu0 0.0
  %742 = vmatpush1.msra.mxu0 %v33
  %743 = vmatprep.subr.mxu0 0.0
  %744 = vmatpush1.msra.mxu0 %v32
  %745 = vmatprep.subr.mxu0 0.0
  %746 = vmatpush1.msra.mxu0 %v31
  %747 = vmatprep.subr.mxu0 0.0
  %748 = vmatpush1.msra.mxu0 %v30
  %749 = vmatprep.subr.mxu0 0.0
  %750 = vmatpush1.msra.mxu0 %v29
  %751 = vmatprep.subr.mxu0 0.0
  %752 = vmatpush1.msra.mxu0 %v28
  %753 = vmatprep.subr.mxu0 0.0
  %754 = vmatpush1.msra.mxu0 %v27
  %755 = vmatprep.subr.mxu0 0.0
  %756 = vmatpush1.msra.mxu0 %v26
  %757 = vmatprep.subr.mxu0 0.0
  %758 = vmatpush1.msra.mxu0 %v25
  %759 = vmatprep.subr.mxu0 0.0
  %760 = vmatpush2.msra.mxu0 0.0
  %761 = vmatprep.subr.mxu0 0.0
  %762 = vmatpush2.msra.mxu0 0.0
  %763 = vmatprep.subr.mxu0 0.0
  %764 = vmatpush2.msra.mxu0 0.0
  %765 = vmatprep.subr.mxu0 0.0
  %766 = vmatpush2.msra.mxu0 0.0
  %767 = vmatprep.subr.mxu0 0.0
  %768 = vmatpush2.msra.mxu0 0.0
  %769 = vmatprep.subr.mxu0 0.0
  %770 = vmatpush2.msra.mxu0 0.0
  %771 = vmatprep.subr.mxu0 0.0
  %772 = vmatpush2.msra.mxu0 0.0
  %773 = vmatprep.subr.mxu0 0.0
  %774 = vmatpush2.msra.mxu0 0.0
  %775 = vmatprep.subr.mxu0 0.0
  %776 = vmatpush2.msra.mxu0 0.0
  %777 = vmatprep.subr.mxu0 0.0
  %778 = vmatpush2.msra.mxu0 0.0
  %779 = vmatprep.subr.mxu0 0.0
  %780 = vmatpush2.msra.mxu0 0.0
  %781 = vmatprep.subr.mxu0 0.0
  %782 = vmatpush2.msra.mxu0 0.0
  %783 = vmatprep.subr.mxu0 0.0
  %784 = vmatpush2.msra.mxu0 0.0
  %785 = vmatprep.subr.mxu0 0.0
  %786 = vmatpush2.msra.mxu0 0.0
  %787 = vmatprep.subr.mxu0 0.0
  %788 = vmatpush2.msra.mxu0 0.0
  %789 = vmatprep.subr.mxu0 0.0
  %790 = vmatpush2.msra.mxu0 0.0
  %791 = vmatprep.mubr.f32.mxu0 0.0
  %792 = vmatmul.mubr.f32.gmra.mxu0 %v725
  %v793 = vpop.f32.mrf.mxu0
  %v794 = vadd.f32 0.0, %v793
  %v795 = vpop.f32.mrf.mxu0
  %796 = vdwg.mxu0
  %v798 = vrot.slane %v794, 1
  %v799 = vrot.slane %v794, 2
  %v802 = vadd.f32 %v127, %v798
  %v803 = vadd.f32 %v132, %v799
  %v804 = vmax.f32 %v802, 0.0
  %v805 = vmax.f32 %v803, 0.0
  %vm806 = vcmask 1040384
  %v807 = vsel %vm806, %v211, %v295
  %v808 = vsel %vm806, %v212, %v296
  %vm809 = vcmask 1041408
  %v810 = vsel %vm809, %v807, %v379
  %v811 = vsel %vm809, %v808, %v380
  %vm812 = vcmask 1042432
  %v813 = vsel %vm812, %v810, %v464
  %v814 = vsel %vm812, %v811, %v465
  %vm815 = vcmask 1043456
  %v816 = vsel %vm815, %v813, %v549
  %v817 = vsel %vm815, %v814, %v550
  %v818 = vsel %vm56, %v816, %v634
  %v819 = vsel %vm56, %v817, %v635
  %vm820 = vcmask 1045504
  %v821 = vsel %vm820, %v818, %v719
  %v822 = vsel %vm820, %v819, %v720
  %vm823 = vcmask 1046528
  %v824 = vsel %vm823, %v821, %v804
  %v825 = vsel %vm823, %v822, %v805
  %v826 = vld [vmem:[%s4] sm:$0xff]
  %v827 = vld [vmem:[%s4 + $0x8] sm:$0xff]
  %v828 = vld [vmem:[%s4 + $0x10] sm:$0xff]
  %v829 = vld [vmem:[%s4 + $0x18] sm:$0xff]
  %v830 = vld [vmem:[%s4 + $0x20] sm:$0xff]
  %v831 = vld [vmem:[%s4 + $0x28] sm:$0xff]
  %v832 = vld [vmem:[%s4 + $0x30] sm:$0xff]
  %v833 = vld [vmem:[%s4 + $0x38] sm:$0xff]
  %v834 = vld [vmem:[%s4 + $0x40] sm:$0xff]
  %v835 = vld [vmem:[%s4 + $0x48] sm:$0xff]
  %v836 = vld [vmem:[%s4 + $0x50] sm:$0xff]
  %v837 = vld [vmem:[%s4 + $0x58] sm:$0xff]
  %v838 = vld [vmem:[%s4 + $0x60] sm:$0xff]
  %v839 = vld [vmem:[%s4 + $0x68] sm:$0xff]
  %v840 = vld [vmem:[%s4 + $0x70] sm:$0xff]
  %v841 = vld [vmem:[%s4 + $0x78] sm:$0xff]
  %v842 = vld [vmem:[%s5] sm:$0x1]
  %v844 = vlaneseq
  %v845 = vshrl.u32 %v844, 7
  %v846 = vsub.s32 0, %v845
  %v847 = vrot.slane %v842, %v846
  %849 = vmatprep.subr.mxu0 0.0
  %850 = vmatpush1.msra.mxu0 %v841
  %851 = vmatprep.subr.mxu0 0.0
  %852 = vmatpush1.msra.mxu0 %v840
  %853 = vmatprep.subr.mxu0 0.0
  %854 = vmatpush1.msra.mxu0 %v839
  %855 = vmatprep.subr.mxu0 0.0
  %856 = vmatpush1.msra.mxu0 %v838
  %857 = vmatprep.subr.mxu0 0.0
  %858 = vmatpush1.msra.mxu0 %v837
  %859 = vmatprep.subr.mxu0 0.0
  %860 = vmatpush1.msra.mxu0 %v836
  %861 = vmatprep.subr.mxu0 0.0
  %862 = vmatpush1.msra.mxu0 %v835
  %863 = vmatprep.subr.mxu0 0.0
  %864 = vmatpush1.msra.mxu0 %v834
  %865 = vmatprep.subr.mxu0 0.0
  %866 = vmatpush1.msra.mxu0 %v833
  %867 = vmatprep.subr.mxu0 0.0
  %868 = vmatpush1.msra.mxu0 %v832
  %869 = vmatprep.subr.mxu0 0.0
  %870 = vmatpush1.msra.mxu0 %v831
  %871 = vmatprep.subr.mxu0 0.0
  %872 = vmatpush1.msra.mxu0 %v830
  %873 = vmatprep.subr.mxu0 0.0
  %874 = vmatpush1.msra.mxu0 %v829
  %875 = vmatprep.subr.mxu0 0.0
  %876 = vmatpush1.msra.mxu0 %v828
  %877 = vmatprep.subr.mxu0 0.0
  %878 = vmatpush1.msra.mxu0 %v827
  %879 = vmatprep.subr.mxu0 0.0
  %880 = vmatpush1.msra.mxu0 %v826
  %881 = vmatprep.subr.mxu0 0.0
  %882 = vmatpush2.msra.mxu0 0.0
  %883 = vmatprep.subr.mxu0 0.0
  %884 = vmatpush2.msra.mxu0 0.0
  %885 = vmatprep.subr.mxu0 0.0
  %886 = vmatpush2.msra.mxu0 0.0
  %887 = vmatprep.subr.mxu0 0.0
  %888 = vmatpush2.msra.mxu0 0.0
  %889 = vmatprep.subr.mxu0 0.0
  %890 = vmatpush2.msra.mxu0 0.0
  %891 = vmatprep.subr.mxu0 0.0
  %892 = vmatpush2.msra.mxu0 0.0
  %893 = vmatprep.subr.mxu0 0.0
  %894 = vmatpush2.msra.mxu0 0.0
  %895 = vmatprep.subr.mxu0 0.0
  %896 = vmatpush2.msra.mxu0 0.0
  %897 = vmatprep.subr.mxu0 0.0
  %898 = vmatpush2.msra.mxu0 0.0
  %899 = vmatprep.subr.mxu0 0.0
  %900 = vmatpush2.msra.mxu0 0.0
  %901 = vmatprep.subr.mxu0 0.0
  %902 = vmatpush2.msra.mxu0 0.0
  %903 = vmatprep.subr.mxu0 0.0
  %904 = vmatpush2.msra.mxu0 0.0
  %905 = vmatprep.subr.mxu0 0.0
  %906 = vmatpush2.msra.mxu0 0.0
  %907 = vmatprep.subr.mxu0 0.0
  %908 = vmatpush2.msra.mxu0 0.0
  %909 = vmatprep.subr.mxu0 0.0
  %910 = vmatpush2.msra.mxu0 0.0
  %911 = vmatprep.subr.mxu0 0.0
  %912 = vmatpush2.msra.mxu0 0.0
  %913 = vmatprep.mubr.f32.mxu0 0.0
  %914 = vmatmul.mubr.f32.gmra.mxu0 %v824
  %v915 = vpop.f32.mrf.mxu0
  %v916 = vadd.f32 %v847, %v915
  %v917 = vpop.f32.mrf.mxu0
  %918 = vmatprep.mubr.f32.mxu0 0.0
  %919 = vmatmul.mubr.f32.gmra.mxu0 %v825
  %v920 = vpop.f32.mrf.mxu0
  %v921 = vadd.f32 %v847, %v920
  %v922 = vpop.f32.mrf.mxu0
  %923 = vdwg.mxu0
  %v924 = vxor.u32 %v916, 2147483648
  %v925 = vxor.u32 %v921, 2147483648
  %v926 = vmul.f32 %v924, 1.442695
  %v927 = vpow.pop %v926
  %v928 = vmul.f32 %v925, 1.442695
  %v929 = vpow.pop %v928
  %v930 = vadd.f32 %v927, 1.0
  %v931 = vadd.f32 %v929, 1.0
  %v932 = vrcp.pop %v930
  %v933 = vmul.f32 1.0, %v932
  %v934 = vrcp.pop %v931
  %v935 = vmul.f32 1.0, %v934
  %936 = vst.msk [vmem:[%s6] sm:$0xff] %vm49, %v933
  %937 = vst.msk [vmem:[%s6 + $0x8] sm:$0xff] %vm49, %v935
  // Predicated region
  $region26: #{identity_rnn_forward.1} parent=0 // pred_check
    _
  $region27: #{identity_rnn_forward.1} parent=0 // pred_check_branch
    %939 = sbr.rel (0) target = $region29
  $region28: #{identity_rnn_forward.1} parent=0 // pred_region
    _
  $region29: #{identity_rnn_forward.1} parent=0 // pred_fallthru
    _
  // Predicated region
  $region30: #{identity_rnn_forward.1} parent=0 // pred_check
    _
  $region31: #{identity_rnn_forward.1} parent=0 // pred_check_branch
    %941 = sbr.rel (0) target = $region33
  $region32: #{identity_rnn_forward.1} parent=0 // pred_region
    _
  $region33: #{identity_rnn_forward.1} parent=0 // pred_fallthru
    _

</llo_original>
